<compile_context>
chip_gen: v7x
topology: tpu7x:2x2x1
jax: 0.10.0
libtpu: 0.0.40
codegen_flags: <defaults>
</compile_context>

<pallas_src>
import functools

import jax
import jax.numpy as jnp
from jax.experimental import pallas as pl
from jax.experimental.pallas import tpu as pltpu


LANE = 128          # TPU lane width: logits are stored padded to this width.
NUM_CLASSES = 17    # nn.Linear(1000, 17)


def _round_up(x, m):
    return (x + m - 1) // m * m


# ---------------------------------------------------------------------------
# Fused Pallas kernel: conv-matmul -> SE gate -> (folded rescale/GAP) -> head.
# One grid step handles `bpg` images; everything stays in VMEM / vregs.
# ---------------------------------------------------------------------------
def _fused_kernel(cols_ref, wm_ref, pv_ref, out_ref, *, bpg, hw, cr):
    c = wm_ref.shape[0]          # channels
    k = cols_ref.shape[0]        # padded im2col K (multiple of 8)
    rows = out_ref.shape[0]      # output sublane rows (multiple of 8)

    # ---- unpack the two packed parameter arrays (static slices) -----------
    cw = wm_ref[:, :k]                          # (C, K)     bf16 conv weight
    wf = wm_ref[:, LANE:]                       # (C, LANE)  bf16 folded classifier
    cb = pv_ref[:c, 0:1]                        # (C, 1)     conv bias
    b1 = pv_ref[:cr, 1:2]                       # (Cr, 1)    SE fc1 bias
    b2 = pv_ref[:c, 2:3]                        # (C, 1)     SE fc2 bias
    w1t = pv_ref[:cr, 4:4 + c]                  # (Cr, C)    SE fc1 weight^T
    w2t = pv_ref[:c, 4 + c:4 + c + cr]          # (C, Cr)    SE fc2 weight^T
    bfv = pv_ref[c:c + 1, :]                    # (1, LANE)  folded head bias

    # ---- 3x3 conv (pre-im2col'd) as ONE lane-dense MXU matmul over the whole
    # per-step batch, bias + ReLU in f32 -------------------------------------
    feat = jnp.dot(cw, cols_ref[...], preferred_element_type=jnp.float32)
    feat = jnp.maximum(feat + cb, 0.0)          # (C, bpg*HW), spatial on lanes

    # ---- per-image global average pool -> (C, bpg) --------------------------
    s = jnp.concatenate(
        [jnp.mean(feat[:, b * hw:(b + 1) * hw], axis=1, keepdims=True)
         for b in range(bpg)],
        axis=1)                                  # (C, bpg) f32

    # ---- squeeze-excite gates, batched over the images of this step --------
    z = jnp.maximum(
        jnp.dot(w1t, s, preferred_element_type=jnp.float32) + b1, 0.0)   # (Cr, bpg)
    g = jax.nn.sigmoid(
        jnp.dot(w2t, z, preferred_element_type=jnp.float32) + b2)        # (C, bpg)

    # GAP(relu(feat*(1+g))) == (1+g) * GAP(feat) exactly (feat>=0, 1+g>0), so
    # rescale + residual + second ReLU + GAP fold onto the pooled vector.
    pooled = s * (1.0 + g)                       # (C, bpg)

    # ---- folded (backbone-FC o head) classifier, per image on the VPU ------
    # (C,1) broadcast-multiply against (C, 128) + sublane reduce -> (1, 128);
    # this sub-MXU-pass matmul is kept off the MXU.
    wf_f32 = wf.astype(jnp.float32)
    logit_rows = [
        jnp.sum(pooled[:, b:b + 1] * wf_f32, axis=0, keepdims=True)
        for b in range(bpg)
    ]
    logits = jnp.concatenate(logit_rows, axis=0) + bfv   # (bpg, LANE) f32

    pad = rows - bpg
    if pad:
        logits = jnp.concatenate(
            [logits, jnp.zeros((pad, LANE), jnp.float32)], axis=0)
    out_ref[...] = logits                        # single dense (rows, 128) store


def _seresnet_pallas(cols_t, wm, pv, *, batch, hw, cr, steps):
    k_pad, bhw = cols_t.shape
    assert bhw == batch * hw
    assert batch % steps == 0, "steps must divide the batch"
    bpg = batch // steps
    assert (bpg * hw) % LANE == 0, "per-step lane extent must be 128-aligned"
    rows = _round_up(bpg, 8)

    kernel = functools.partial(_fused_kernel, bpg=bpg, hw=hw, cr=cr)
    out = pl.pallas_call(
        kernel,
        out_shape=jax.ShapeDtypeStruct((steps * rows, LANE), jnp.float32),
        grid_spec=pltpu.PrefetchScalarGridSpec(
            num_scalar_prefetch=0,
            grid=(steps,),
            in_specs=[
                # per-step image group: lane-contiguous (K, bpg*HW) block
                pl.BlockSpec((k_pad, bpg * hw), lambda g: (0, g)),
                # packed bf16 MXU weights, fetched once, resident across steps
                pl.BlockSpec(wm.shape, lambda g: (0, 0)),
                # packed f32 small params (biases, SE weights, folded bias)
                pl.BlockSpec(pv.shape, lambda g: (0, 0)),
            ],
            out_specs=pl.BlockSpec((rows, LANE), lambda g: (g, 0)),
        ),
        compiler_params=pltpu.CompilerParams(
            dimension_semantics=("parallel",)),   # steps=2 shards batch on v7x
    )(cols_t, wm, pv)

    # (steps, rows, LANE) -> (batch, LANE), dropping the sublane padding rows.
    return out.reshape(steps, rows, LANE)[:, :bpg, :].reshape(batch, LANE)


# ---------------------------------------------------------------------------
# Wrapper glue (layout / im2col / parameter preparation) — plain JAX.
# ---------------------------------------------------------------------------
def build_cols(x_nchw, k_pad):
    """(B, Cin, H, W) -> (K_pad, B*HW) bf16 transposed im2col for 3x3 'same'."""
    B, Cin, H, W = x_nchw.shape
    x = jnp.transpose(x_nchw, (0, 2, 3, 1)).astype(jnp.bfloat16)   # NHWC bf16
    xp = jnp.pad(x, ((0, 0), (1, 1), (1, 1), (0, 0)))
    patches = [xp[:, di:di + H, dj:dj + W, :]
               for di in range(3) for dj in range(3)]
    cols = jnp.concatenate(patches, axis=-1).reshape(B, H * W, 9 * Cin)
    cols = jnp.transpose(cols, (2, 0, 1)).reshape(9 * Cin, B * H * W)
    return jnp.pad(cols, ((0, k_pad - 9 * Cin), (0, 0)))           # (K_pad, B*HW)


def init_params(key, cin=3, c=16, r=4, feat=1000, num_classes=NUM_CLASSES):
    """PyTorch-style parameters of the module (backbone + Linear(1000, 17))."""
    ks = jax.random.split(key, 9)

    def u(k, shape, scale):
        return jax.random.uniform(k, shape, jnp.float32, -scale, scale)

    p = {}
    p["conv_w"] = u(ks[0], (3, 3, cin, c), 0.2)        # HWIO
    p["conv_b"] = u(ks[1], (c,), 0.1)
    p["se_w1"] = u(ks[2], (c, c // r), 0.3)
    p["se_b1"] = u(ks[3], (c // r,), 0.1)
    p["se_w2"] = u(ks[4], (c // r, c), 0.3)
    p["se_b2"] = u(ks[5], (c,), 0.1)
    p["fc_w"] = u(ks[6], (c, feat), 0.1)               # backbone classifier -> 1000
    p["fc_b"] = jnp.zeros((feat,), jnp.float32)
    p["head_w"] = u(ks[7], (feat, num_classes), 0.03)  # nn.Linear(1000, 17)
    p["head_b"] = u(ks[8], (num_classes,), 0.03)
    return p


def prepare_params(params):
    """One-time fold / pack / re-layout of module params into kernel form."""
    kh, kw, cin, c = params["conv_w"].shape
    cr = params["se_w1"].shape[1]
    k9 = kh * kw * cin
    k_pad = _round_up(k9, 8)
    assert k_pad <= LANE and 4 + c + cr <= LANE and c % 8 == 0

    # (C, K) conv weight with K zero-padded to a multiple of 8.
    cw = jnp.pad(params["conv_w"].reshape(k9, c).T, ((0, 0), (0, k_pad - k9)))

    # Exact fold of the C->1000 backbone FC with the 1000->17 head (no
    # nonlinearity between them).
    w_fold = params["fc_w"] @ params["head_w"]                      # (C, 17)
    b_fold = params["fc_b"] @ params["head_w"] + params["head_b"]   # (17,)

    # Packed bf16 MXU weights: [:, :k_pad] = conv weight, [:, LANE:] = folded
    # classifier (class dim zero-padded to a full 128-lane tile).
    wm = jnp.zeros((c, 2 * LANE), jnp.float32)
    wm = wm.at[:, :k_pad].set(cw)
    wm = wm.at[:, LANE:LANE + NUM_CLASSES].set(w_fold)
    wm = wm.astype(jnp.bfloat16)

    # Packed f32 small params: biases in columns 0..2, SE weights (transposed)
    # in columns 4.., folded head bias in the last row.
    pv = jnp.zeros((c + 1, LANE), jnp.float32)
    pv = pv.at[:c, 0].set(params["conv_b"])
    pv = pv.at[:cr, 1].set(params["se_b1"])
    pv = pv.at[:c, 2].set(params["se_b2"])
    pv = pv.at[:cr, 4:4 + c].set(params["se_w1"].T)
    pv = pv.at[:c, 4 + c:4 + c + cr].set(params["se_w2"].T)
    pv = pv.at[c, :NUM_CLASSES].set(b_fold)

    return {"wm": wm, "pv": pv}, cr


@functools.partial(jax.jit, static_argnames=("cr", "steps"))
def seresnet_forward(kparams, x_nchw, *, cr, steps=1):
    B, Cin, H, W = x_nchw.shape
    k_pad = _round_up(9 * Cin, 8)
    cols_t = build_cols(x_nchw, k_pad)                   # (K_pad, B*HW) bf16
    padded = _seresnet_pallas(cols_t, kparams["wm"], kparams["pv"],
                              batch=B, hw=H * W, cr=cr, steps=steps)
    return padded[:, :NUM_CLASSES]                       # (B, 17) f32


if __name__ == "__main__":
    key = jax.random.PRNGKey(0)
    k_param, k_input = jax.random.split(key)
    params = init_params(k_param)
    kparams, cr = prepare_params(params)   # one-time fold/pack (not per-step)
    x = jax.random.normal(k_input, (2, 3, 16, 16), dtype=jnp.float32)  # NCHW

    # steps=1: whole batch in one grid step (best on v5e/v6e).  On v7x use
    # steps=2 so each TensorCore processes half the batch.
    out = seresnet_forward(kparams, x, cr=cr, steps=1)
    out = jax.block_until_ready(out)

    assert out.shape == (2, NUM_CLASSES), out.shape
    assert out.dtype == jnp.float32
    assert bool(jnp.all(jnp.isfinite(out)))
    print("KERNEL_OK")
</pallas_src>

<mosaic_0001>
module attributes {stable_mosaic.version = 11 : i64} {
  func.func @_fused_kernel(%arg0: i32, %arg1: memref<32x512xbf16, #tpu.memory_space<vmem>>, %arg2: memref<16x256xbf16, #tpu.memory_space<vmem>>, %arg3: memref<17x128xf32, #tpu.memory_space<vmem>>, %arg4: memref<8x128xf32, #tpu.memory_space<vmem>>) attributes {dimension_semantics = [#tpu.dimension_semantics<parallel>], iteration_bounds = array<i64: 1>, scalar_prefetch = 0 : i64, scratch_operands = 0 : i64, tpu.core_type = #tpu.core_type<tc>, window_params = [{transform_indices = @transform_0, window_bounds = array<i64: 32, 512>}, {pipeline_mode = #tpu.pipeline_mode<synchronous>, transform_indices = @transform_1, window_bounds = array<i64: 16, 256>}, {pipeline_mode = #tpu.pipeline_mode<synchronous>, transform_indices = @transform_2, window_bounds = array<i64: 17, 128>}, {transform_indices = @transform_3, window_bounds = array<i64: 8, 128>}]} {
    %c0 = arith.constant 0 : index
    %c0_0 = arith.constant 0 : index
    %0 = vector.load %arg2[%c0, %c0_0] : memref<16x256xbf16, #tpu.memory_space<vmem>>, vector<16x32xbf16>
    %c0_1 = arith.constant 0 : index
    %c128 = arith.constant 128 : index
    %1 = vector.load %arg2[%c0_1, %c128] : memref<16x256xbf16, #tpu.memory_space<vmem>>, vector<16x128xbf16>
    %c0_2 = arith.constant 0 : index
    %c0_3 = arith.constant 0 : index
    %2 = vector.load %arg3[%c0_2, %c0_3] : memref<17x128xf32, #tpu.memory_space<vmem>>, vector<16x1xf32>
    %c0_4 = arith.constant 0 : index
    %c1 = arith.constant 1 : index
    %3 = vector.load %arg3[%c0_4, %c1] : memref<17x128xf32, #tpu.memory_space<vmem>>, vector<4x1xf32>
    %c0_5 = arith.constant 0 : index
    %c2 = arith.constant 2 : index
    %4 = vector.load %arg3[%c0_5, %c2] : memref<17x128xf32, #tpu.memory_space<vmem>>, vector<16x1xf32>
    %c0_6 = arith.constant 0 : index
    %c4 = arith.constant 4 : index
    %5 = vector.load %arg3[%c0_6, %c4] : memref<17x128xf32, #tpu.memory_space<vmem>>, vector<4x16xf32>
    %c0_7 = arith.constant 0 : index
    %c20 = arith.constant 20 : index
    %6 = vector.load %arg3[%c0_7, %c20] : memref<17x128xf32, #tpu.memory_space<vmem>>, vector<16x4xf32>
    %c16 = arith.constant 16 : index
    %c0_8 = arith.constant 0 : index
    %7 = vector.load %arg3[%c16, %c0_8] : memref<17x128xf32, #tpu.memory_space<vmem>>, vector<1x128xf32>
    %c0_9 = arith.constant 0 : index
    %c0_10 = arith.constant 0 : index
    %8 = vector.load %arg1[%c0_9, %c0_10] : memref<32x512xbf16, #tpu.memory_space<vmem>>, vector<32x512xbf16>
    %cst = arith.constant dense<0.000000e+00> : vector<16x512xf32>
    %9 = tpu.matmul %0, %8, %cst {dimension_numbers = #tpu.dot_dimension_numbers<[1], [0], [0], [1], [0, 0, 1, 1], [], []>} : vector<16x32xbf16>, vector<32x512xbf16>, vector<16x512xf32> -> vector<16x512xf32>
    %10 = vector.broadcast %2 : vector<16x1xf32> to vector<16x512xf32>
    %11 = arith.addf %9, %10 : vector<16x512xf32>
    %cst_11 = arith.constant 0.000000e+00 : f32
    %12 = vector.broadcast %cst_11 : f32 to vector<16x512xf32>
    %13 = arith.maximumf %11, %12 : vector<16x512xf32>
    %14 = vector.extract_strided_slice %13 {offsets = [0, 0], sizes = [16, 256], strides = [1, 1]} : vector<16x512xf32> to vector<16x256xf32>
    %cst_12 = arith.constant dense<0.000000e+00> : vector<16xf32>
    %15 = vector.multi_reduction <add>, %14, %cst_12 [1] : vector<16x256xf32> to vector<16xf32>
    %16 = vector.shape_cast %15 : vector<16xf32> to vector<16x1xf32>
    %cst_13 = arith.constant 2.560000e+02 : f32
    %17 = vector.broadcast %cst_13 : f32 to vector<16x1xf32>
    %18 = arith.divf %16, %17 : vector<16x1xf32>
    %19 = vector.extract_strided_slice %13 {offsets = [0, 256], sizes = [16, 256], strides = [1, 1]} : vector<16x512xf32> to vector<16x256xf32>
    %cst_14 = arith.constant dense<0.000000e+00> : vector<16xf32>
    %20 = vector.multi_reduction <add>, %19, %cst_14 [1] : vector<16x256xf32> to vector<16xf32>
    %21 = vector.shape_cast %20 : vector<16xf32> to vector<16x1xf32>
    %cst_15 = arith.constant 2.560000e+02 : f32
    %22 = vector.broadcast %cst_15 : f32 to vector<16x1xf32>
    %23 = arith.divf %21, %22 : vector<16x1xf32>
    %24 = tpu.concatenate %18, %23 in 1 : vector<16x1xf32>, vector<16x1xf32> -> vector<16x2xf32>
    %cst_16 = arith.constant dense<0.000000e+00> : vector<4x2xf32>
    %25 = tpu.matmul %5, %24, %cst_16 {dimension_numbers = #tpu.dot_dimension_numbers<[1], [0], [0], [1], [0, 0, 1, 1], [], []>} : vector<4x16xf32>, vector<16x2xf32>, vector<4x2xf32> -> vector<4x2xf32>
    %26 = vector.broadcast %3 : vector<4x1xf32> to vector<4x2xf32>
    %27 = arith.addf %25, %26 : vector<4x2xf32>
    %cst_17 = arith.constant 0.000000e+00 : f32
    %28 = vector.broadcast %cst_17 : f32 to vector<4x2xf32>
    %29 = arith.maximumf %27, %28 : vector<4x2xf32>
    %cst_18 = arith.constant dense<0.000000e+00> : vector<16x2xf32>
    %30 = tpu.matmul %6, %29, %cst_18 {dimension_numbers = #tpu.dot_dimension_numbers<[1], [0], [0], [1], [0, 0, 1, 1], [], []>} : vector<16x4xf32>, vector<4x2xf32>, vector<16x2xf32> -> vector<16x2xf32>
    %31 = vector.broadcast %4 : vector<16x1xf32> to vector<16x2xf32>
    %32 = arith.addf %30, %31 : vector<16x2xf32>
    %33 = arith.negf %32 : vector<16x2xf32>
    %34 = math.exp %33 : vector<16x2xf32>
    %cst_19 = arith.constant 1.000000e+00 : f32
    %35 = vector.broadcast %cst_19 : f32 to vector<16x2xf32>
    %36 = arith.addf %35, %34 : vector<16x2xf32>
    %37 = arith.divf %35, %36 : vector<16x2xf32>
    %cst_20 = arith.constant 1.000000e+00 : f32
    %38 = vector.broadcast %cst_20 : f32 to vector<16x2xf32>
    %39 = arith.addf %38, %37 : vector<16x2xf32>
    %40 = arith.mulf %24, %39 : vector<16x2xf32>
    %41 = arith.extf %1 : vector<16x128xbf16> to vector<16x128xf32>
    %42 = vector.extract_strided_slice %40 {offsets = [0, 0], sizes = [16, 1], strides = [1, 1]} : vector<16x2xf32> to vector<16x1xf32>
    %43 = vector.broadcast %42 : vector<16x1xf32> to vector<16x128xf32>
    %44 = arith.mulf %43, %41 : vector<16x128xf32>
    %cst_21 = arith.constant dense<0.000000e+00> : vector<128xf32>
    %45 = vector.multi_reduction <add>, %44, %cst_21 [0] : vector<16x128xf32> to vector<128xf32>
    %46 = vector.shape_cast %45 : vector<128xf32> to vector<1x128xf32>
    %47 = vector.extract_strided_slice %40 {offsets = [0, 1], sizes = [16, 1], strides = [1, 1]} : vector<16x2xf32> to vector<16x1xf32>
    %48 = vector.broadcast %47 : vector<16x1xf32> to vector<16x128xf32>
    %49 = arith.mulf %48, %41 : vector<16x128xf32>
    %cst_22 = arith.constant dense<0.000000e+00> : vector<128xf32>
    %50 = vector.multi_reduction <add>, %49, %cst_22 [0] : vector<16x128xf32> to vector<128xf32>
    %51 = vector.shape_cast %50 : vector<128xf32> to vector<1x128xf32>
    %52 = tpu.concatenate %46, %51 in 0 : vector<1x128xf32>, vector<1x128xf32> -> vector<2x128xf32>
    %53 = vector.broadcast %7 : vector<1x128xf32> to vector<2x128xf32>
    %54 = arith.addf %52, %53 : vector<2x128xf32>
    %cst_23 = arith.constant 0.000000e+00 : f32
    %55 = vector.broadcast %cst_23 : f32 to vector<6x128xf32>
    %56 = tpu.concatenate %54, %55 in 0 : vector<2x128xf32>, vector<6x128xf32> -> vector<8x128xf32>
    %c0_24 = arith.constant 0 : index
    %c0_25 = arith.constant 0 : index
    %57 = vector.load %arg4[%c0_24, %c0_25] : memref<8x128xf32, #tpu.memory_space<vmem>>, vector<8x128xf32>
    tpu.vector_store %arg4[%c0_24, %c0_25], %56 {strides = array<i32>} : memref<8x128xf32, #tpu.memory_space<vmem>>, vector<8x128xf32>,
    return
  }
  func.func @transform_0(%arg0: i32) -> (i32, i32) {
    %c0_i32 = arith.constant 0 : i32
    %c0_i32_0 = arith.constant 0 : i32
    return %c0_i32, %arg0 : i32, i32
  }
  func.func @transform_1(%arg0: i32) -> (i32, i32) {
    %c0_i32 = arith.constant 0 : i32
    %c0_i32_0 = arith.constant 0 : i32
    %c0_i32_1 = arith.constant 0 : i32
    return %c0_i32, %c0_i32_0 : i32, i32
  }
  func.func @transform_2(%arg0: i32) -> (i32, i32) {
    %c0_i32 = arith.constant 0 : i32
    %c0_i32_0 = arith.constant 0 : i32
    %c0_i32_1 = arith.constant 0 : i32
    return %c0_i32, %c0_i32_0 : i32, i32
  }
  func.func @transform_3(%arg0: i32) -> (i32, i32) {
    %c0_i32 = arith.constant 0 : i32
    %c0_i32_0 = arith.constant 0 : i32
    return %arg0, %c0_i32 : i32, i32
  }
}

</mosaic_0001>

<llo_original>
// kernel: seresnet_forward.1
$region0: #{seresnet_forward.1}
  #allocation0 [shape = 'u32[]', space=smem, size = 0x4, offset = 0x4, fixed_abs, tag = 'smem constant byte address 0x4 - core index']
  #allocation1 [shape = 'u32[144,128]{1,0:T(1,128)}', space=vmem, size = 0x12000, scoped, tag = 'internal scratch']
  %s0 = inlined_call_operand.vmem [shape: bf16[32,512], index: 0, kind: input, shape index: {}]
  %s1 = inlined_call_operand.vmem [shape: bf16[16,256], index: 1, kind: input, shape index: {}]
  %s2 = inlined_call_operand.vmem [shape: f32[17,128], index: 2, kind: input, shape index: {}]
  %s3 = inlined_call_operand.vmem [shape: f32[8,128], index: 3, kind: output, shape index: {}]
  %s4 = sld [smem:[#allocation0]]
  $region22: #{seresnet_forward.1} parent=0
    _
  %s6 = ssub.s32 1, %s4
  %s7 = scalar_select 0, %s6, %s4
  // Predicated region
  $region2: #{seresnet_forward.1} parent=0 // pred_check
    _
  $region3: #{seresnet_forward.1} parent=0 // pred_check_branch
    %9 = sbr.rel (0) target = $region5
  $region4: #{seresnet_forward.1} parent=0 // pred_region
    _
  $region5: #{seresnet_forward.1} parent=0 // pred_fallthru
    _
  // Predicated region
  $region6: #{seresnet_forward.1} parent=0 // pred_check
    _
  $region7: #{seresnet_forward.1} parent=0 // pred_check_branch
    %11 = sbr.rel (0) target = $region9
  $region8: #{seresnet_forward.1} parent=0 // pred_region
    _
  $region9: #{seresnet_forward.1} parent=0 // pred_fallthru
    _
  // Predicated region
  $region10: #{seresnet_forward.1} parent=0 // pred_check
    _
  $region11: #{seresnet_forward.1} parent=0 // pred_check_branch
    %13 = sbr.rel (0) target = $region13
  $region12: #{seresnet_forward.1} parent=0 // pred_region
    _
  $region13: #{seresnet_forward.1} parent=0 // pred_fallthru
    _
  %v15 = vld [vmem:[%s1] sm:$0xf]
  %v16 = vld [vmem:[%s1 + $0x8] sm:$0xf]
  %v17 = vld [vmem:[%s1 + $0x4] sm:$0xf]
  %v18 = vld [vmem:[%s1 + $0xc] sm:$0xf]
  %v19 = vld [vmem:[%s2] sm:$0xff]
  %v20 = vld [vmem:[%s2 + $0x8] sm:$0xff]
  %v21 = vld [vmem:[%s2] sm:$0xf]
  %v22 = vld [vmem:[%s2 + $0x10] sm:$0x1]
  %v23 = vld [vmem:[%s0] sm:$0xff]
  %v24 = vld [vmem:[%s0 + $0x8] sm:$0xff]
  %v25 = vld [vmem:[%s0 + $0x10] sm:$0xff]
  %v26 = vld [vmem:[%s0 + $0x18] sm:$0xff]
  %v27 = vld [vmem:[%s0 + $0x20] sm:$0xff]
  %v28 = vld [vmem:[%s0 + $0x28] sm:$0xff]
  %v29 = vld [vmem:[%s0 + $0x30] sm:$0xff]
  %v30 = vld [vmem:[%s0 + $0x38] sm:$0xff]
  %32 = vset.pattern.permute.xlu0 0
  %33 = vperm.xlu0 %32, %v19
  %v34 = vpop.permute.xlu0 %33
  %37 = vset.pattern.permute.xlu0 0
  %38 = vperm.xlu0 %37, %v20
  %v39 = vpop.permute.xlu0 %38
  %v43 = vunpack.c.l.b16 %v15
  %v44 = vunpack.c.l.b16 %v16
  %v45 = vpack.c.b16 %v44, %v43
  %v54 = vunpack.c.l.b16 %v23
  %v55 = vunpack.c.h.b16 %v23
  %v56 = vunpack.c.l.b16 %v24
  %v57 = vunpack.c.h.b16 %v24
  %v58 = vunpack.c.l.b16 %v25
  %v59 = vunpack.c.h.b16 %v25
  %v60 = vunpack.c.l.b16 %v26
  %v61 = vunpack.c.h.b16 %v26
  %v62 = vunpack.c.l.b16 %v27
  %v63 = vunpack.c.h.b16 %v27
  %v64 = vunpack.c.l.b16 %v28
  %v65 = vunpack.c.h.b16 %v28
  %v66 = vunpack.c.l.b16 %v29
  %v67 = vunpack.c.h.b16 %v29
  %v68 = vunpack.c.l.b16 %v30
  %v69 = vunpack.c.h.b16 %v30
  %v70 = vpack.c.b16 %v58, %v54
  %v71 = vpack.c.b16 %v59, %v55
  %v72 = vpack.c.b16 %v60, %v56
  %v73 = vpack.c.b16 %v61, %v57
  %v74 = vpack.c.b16 %v66, %v62
  %v75 = vpack.c.b16 %v67, %v63
  %v76 = vpack.c.b16 %v68, %v64
  %v77 = vpack.c.b16 %v69, %v65
  %vm86 = vcmask 261120
  %v88 = vsel %vm86, %v45, 0
  %90 = vmatprep.subr.bf16.mxu0 %v71
  %91 = vmatpush1.bf16.msra.mxu0 %v70
  %92 = vmatprep.subr.bf16.mxu0 %v75
  %93 = vmatpush1.bf16.msra.mxu0 %v74
  %94 = vmatprep.subr.bf16.mxu0 0
  %95 = vmatpush1.bf16.msra.mxu0 0
  %96 = vmatprep.subr.bf16.mxu0 0
  %97 = vmatpush1.bf16.msra.mxu0 0
  %98 = vmatprep.subr.bf16.mxu0 0
  %99 = vmatpush1.bf16.msra.mxu0 0
  %100 = vmatprep.subr.bf16.mxu0 0
  %101 = vmatpush1.bf16.msra.mxu0 0
  %102 = vmatprep.subr.bf16.mxu0 0
  %103 = vmatpush1.bf16.msra.mxu0 0
  %104 = vmatprep.subr.bf16.mxu0 0
  %105 = vmatpush1.bf16.msra.mxu0 0
  %106 = vmatprep.subr.bf16.mxu0 0
  %107 = vmatpush1.bf16.msra.mxu0 0
  %108 = vmatprep.subr.bf16.mxu0 0
  %109 = vmatpush1.bf16.msra.mxu0 0
  %110 = vmatprep.subr.bf16.mxu0 0
  %111 = vmatpush1.bf16.msra.mxu0 0
  %112 = vmatprep.subr.bf16.mxu0 0
  %113 = vmatpush1.bf16.msra.mxu0 0
  %114 = vmatprep.subr.bf16.mxu0 0
  %115 = vmatpush1.bf16.msra.mxu0 0
  %116 = vmatprep.subr.bf16.mxu0 0
  %117 = vmatpush1.bf16.msra.mxu0 0
  %118 = vmatprep.subr.bf16.mxu0 0
  %119 = vmatpush1.bf16.msra.mxu0 0
  %120 = vmatprep.subr.bf16.mxu0 0
  %121 = vmatpush1.bf16.msra.mxu0 0
  %122 = vmatprep.mubr.bf16.mxu0 0
  %123 = vmatmul.mubr.bf16.gmra.mrb[0].mxu0 %v88
  %v124 = vpop.f32.mrb[0].mxu0
  %v125 = vadd.f32 %v34, %v124
  %v126 = vpop.f32.mrb[0].mxu0
  %v127 = vadd.f32 %v34, %v126
  %v128 = vpop.f32.mrb[0].mxu0
  %v129 = vadd.f32 %v39, %v128
  %v130 = vpop.f32.mrb[0].mxu0
  %v131 = vadd.f32 %v39, %v130
  %132 = vdwg.mxu0
  %133 = vmatprep.subr.bf16.mxu0 %v73
  %134 = vmatpush1.bf16.msra.mxu0 %v72
  %135 = vmatprep.subr.bf16.mxu0 %v77
  %136 = vmatpush1.bf16.msra.mxu0 %v76
  %137 = vmatprep.subr.bf16.mxu0 0
  %138 = vmatpush1.bf16.msra.mxu0 0
  %139 = vmatprep.subr.bf16.mxu0 0
  %140 = vmatpush1.bf16.msra.mxu0 0
  %141 = vmatprep.subr.bf16.mxu0 0
  %142 = vmatpush1.bf16.msra.mxu0 0
  %143 = vmatprep.subr.bf16.mxu0 0
  %144 = vmatpush1.bf16.msra.mxu0 0
  %145 = vmatprep.subr.bf16.mxu0 0
  %146 = vmatpush1.bf16.msra.mxu0 0
  %147 = vmatprep.subr.bf16.mxu0 0
  %148 = vmatpush1.bf16.msra.mxu0 0
  %149 = vmatprep.subr.bf16.mxu0 0
  %150 = vmatpush1.bf16.msra.mxu0 0
  %151 = vmatprep.subr.bf16.mxu0 0
  %152 = vmatpush1.bf16.msra.mxu0 0
  %153 = vmatprep.subr.bf16.mxu0 0
  %154 = vmatpush1.bf16.msra.mxu0 0
  %155 = vmatprep.subr.bf16.mxu0 0
  %156 = vmatpush1.bf16.msra.mxu0 0
  %157 = vmatprep.subr.bf16.mxu0 0
  %158 = vmatpush1.bf16.msra.mxu0 0
  %159 = vmatprep.subr.bf16.mxu0 0
  %160 = vmatpush1.bf16.msra.mxu0 0
  %161 = vmatprep.subr.bf16.mxu0 0
  %162 = vmatpush1.bf16.msra.mxu0 0
  %163 = vmatprep.subr.bf16.mxu0 0
  %164 = vmatpush1.bf16.msra.mxu0 0
  %165 = vmatprep.mubr.bf16.mxu0 0
  %166 = vmatmul.mubr.bf16.gmra.mrb[0].mxu0 %v88
  %v167 = vpop.f32.mrb[0].mxu0
  %v168 = vadd.f32 %v34, %v167
  %v169 = vpop.f32.mrb[0].mxu0
  %v170 = vadd.f32 %v34, %v169
  %v171 = vpop.f32.mrb[0].mxu0
  %v172 = vadd.f32 %v39, %v171
  %v173 = vpop.f32.mrb[0].mxu0
  %v174 = vadd.f32 %v39, %v173
  %175 = vdwg.mxu0
  %v176 = vmax.f32 %v125, 0.0
  %v177 = vmax.f32 %v127, 0.0
  %v178 = vmax.f32 %v168, 0.0
  %v179 = vmax.f32 %v170, 0.0
  %v180 = vmax.f32 %v129, 0.0
  %v181 = vmax.f32 %v131, 0.0
  %v182 = vmax.f32 %v172, 0.0
  %v183 = vmax.f32 %v174, 0.0
  %v184 = vadd.f32 %v176, %v177
  %185 = vadd.xlane.f32.xlu0 %v184
  %v186 = vpop.xlane.xlu0 %185
  %v187 = vadd.f32 %v180, %v181
  %188 = vadd.xlane.f32.xlu0 %v187
  %v189 = vpop.xlane.xlu0 %188
  %v190 = vrcp.pop 256.0
  %v191 = vmul.f32 %v186, %v190
  %v192 = vmul.f32 %v189, %v190
  %v193 = vadd.f32 %v178, %v179
  %194 = vadd.xlane.f32.xlu0 %v193
  %v195 = vpop.xlane.xlu0 %194
  %v196 = vadd.f32 %v182, %v183
  %197 = vadd.xlane.f32.xlu0 %v196
  %v198 = vpop.xlane.xlu0 %197
  %v199 = vmul.f32 %v195, %v190
  %v200 = vmul.f32 %v198, %v190
  %vm201 = vcmask 7168
  %v202 = vsel %vm201, %v191, %v199
  %v203 = vsel %vm201, %v192, %v200
  %205 = vset.pattern.permute.xlu0 1
  %206 = vperm.xlu0 %205, %v21
  %v207 = vpop.permute.xlu0 %206
  %209 = vrot.lane.b32.xlu0 %v21, 124
  %v210 = vpop.permute.xlu0 %209
  %vm211 = vcmask 130048
  %v212 = vsel %vm211, %v210, 0
  %214 = vmatprep.subr.mxu0 0.0
  %215 = vmatpush1.msra.mxu0 %v202
  %216 = vmatprep.subr.mxu0 0.0
  %217 = vmatpush1.msra.mxu0 %v203
  %218 = vmatprep.subr.mxu0 0.0
  %219 = vmatpush1.msra.mxu0 0.0
  %220 = vmatprep.subr.mxu0 0.0
  %221 = vmatpush1.msra.mxu0 0.0
  %222 = vmatprep.subr.mxu0 0.0
  %223 = vmatpush1.msra.mxu0 0.0
  %224 = vmatprep.subr.mxu0 0.0
  %225 = vmatpush1.msra.mxu0 0.0
  %226 = vmatprep.subr.mxu0 0.0
  %227 = vmatpush1.msra.mxu0 0.0
  %228 = vmatprep.subr.mxu0 0.0
  %229 = vmatpush1.msra.mxu0 0.0
  %230 = vmatprep.subr.mxu0 0.0
  %231 = vmatpush1.msra.mxu0 0.0
  %232 = vmatprep.subr.mxu0 0.0
  %233 = vmatpush1.msra.mxu0 0.0
  %234 = vmatprep.subr.mxu0 0.0
  %235 = vmatpush1.msra.mxu0 0.0
  %236 = vmatprep.subr.mxu0 0.0
  %237 = vmatpush1.msra.mxu0 0.0
  %238 = vmatprep.subr.mxu0 0.0
  %239 = vmatpush1.msra.mxu0 0.0
  %240 = vmatprep.subr.mxu0 0.0
  %241 = vmatpush1.msra.mxu0 0.0
  %242 = vmatprep.subr.mxu0 0.0
  %243 = vmatpush1.msra.mxu0 0.0
  %244 = vmatprep.subr.mxu0 0.0
  %245 = vmatpush1.msra.mxu0 0.0
  %246 = vmatprep.subr.mxu0 0.0
  %247 = vmatpush1.msra.mxu0 0.0
  %248 = vmatprep.subr.mxu0 0.0
  %249 = vmatpush1.msra.mxu0 0.0
  %250 = vmatprep.subr.mxu0 0.0
  %251 = vmatpush1.msra.mxu0 0.0
  %252 = vmatprep.subr.mxu0 0.0
  %253 = vmatpush1.msra.mxu0 0.0
  %254 = vmatprep.subr.mxu0 0.0
  %255 = vmatpush1.msra.mxu0 0.0
  %256 = vmatprep.subr.mxu0 0.0
  %257 = vmatpush1.msra.mxu0 0.0
  %258 = vmatprep.subr.mxu0 0.0
  %259 = vmatpush1.msra.mxu0 0.0
  %260 = vmatprep.subr.mxu0 0.0
  %261 = vmatpush1.msra.mxu0 0.0
  %262 = vmatprep.subr.mxu0 0.0
  %263 = vmatpush1.msra.mxu0 0.0
  %264 = vmatprep.subr.mxu0 0.0
  %265 = vmatpush1.msra.mxu0 0.0
  %266 = vmatprep.subr.mxu0 0.0
  %267 = vmatpush1.msra.mxu0 0.0
  %268 = vmatprep.subr.mxu0 0.0
  %269 = vmatpush1.msra.mxu0 0.0
  %270 = vmatprep.subr.mxu0 0.0
  %271 = vmatpush1.msra.mxu0 0.0
  %272 = vmatprep.subr.mxu0 0.0
  %273 = vmatpush1.msra.mxu0 0.0
  %274 = vmatprep.subr.mxu0 0.0
  %275 = vmatpush1.msra.mxu0 0.0
  %276 = vmatprep.subr.mxu0 0.0
  %277 = vmatpush1.msra.mxu0 0.0
  %278 = vmatprep.mubr.f32.mxu0 0.0
  %279 = vmatmul.mubr.f32.gmra.mrb[0].mxu0 %v212
  %v280 = vpop.f32.mrb[0].mxu0
  %v281 = vadd.f32 %v207, %v280
  %v282 = vpop.f32.mrb[0].mxu0
  %283 = vdwg.mxu0
  %v284 = vmax.f32 %v281, 0.0
  %285 = vset.pattern.permute.xlu0 2
  %286 = vperm.xlu0 %285, %v19
  %v287 = vpop.permute.xlu0 %286
  %289 = vset.pattern.permute.xlu0 2
  %290 = vperm.xlu0 %289, %v20
  %v291 = vpop.permute.xlu0 %290
  %293 = vrot.lane.b32.xlu0 %v19, 108
  %v294 = vpop.permute.xlu0 %293
  %295 = vrot.lane.b32.xlu0 %v20, 108
  %v296 = vpop.permute.xlu0 %295
  %vm297 = vcmask 31744
  %v298 = vsel %vm297, %v294, 0
  %v300 = vsel %vm297, %v296, 0
  %vm302 = vcmask 1043456
  %v304 = vsel %vm302, %v284, 0
  %306 = vmatprep.subr.mxu0 0.0
  %307 = vmatpush1.msra.mxu0 %v304
  %308 = vmatprep.subr.mxu0 0.0
  %309 = vmatpush1.msra.mxu0 0.0
  %310 = vmatprep.subr.mxu0 0.0
  %311 = vmatpush1.msra.mxu0 0.0
  %312 = vmatprep.subr.mxu0 0.0
  %313 = vmatpush1.msra.mxu0 0.0
  %314 = vmatprep.subr.mxu0 0.0
  %315 = vmatpush1.msra.mxu0 0.0
  %316 = vmatprep.subr.mxu0 0.0
  %317 = vmatpush1.msra.mxu0 0.0
  %318 = vmatprep.subr.mxu0 0.0
  %319 = vmatpush1.msra.mxu0 0.0
  %320 = vmatprep.subr.mxu0 0.0
  %321 = vmatpush1.msra.mxu0 0.0
  %322 = vmatprep.subr.mxu0 0.0
  %323 = vmatpush1.msra.mxu0 0.0
  %324 = vmatprep.subr.mxu0 0.0
  %325 = vmatpush1.msra.mxu0 0.0
  %326 = vmatprep.subr.mxu0 0.0
  %327 = vmatpush1.msra.mxu0 0.0
  %328 = vmatprep.subr.mxu0 0.0
  %329 = vmatpush1.msra.mxu0 0.0
  %330 = vmatprep.subr.mxu0 0.0
  %331 = vmatpush1.msra.mxu0 0.0
  %332 = vmatprep.subr.mxu0 0.0
  %333 = vmatpush1.msra.mxu0 0.0
  %334 = vmatprep.subr.mxu0 0.0
  %335 = vmatpush1.msra.mxu0 0.0
  %336 = vmatprep.subr.mxu0 0.0
  %337 = vmatpush1.msra.mxu0 0.0
  %338 = vmatprep.subr.mxu0 0.0
  %339 = vmatpush1.msra.mxu0 0.0
  %340 = vmatprep.subr.mxu0 0.0
  %341 = vmatpush1.msra.mxu0 0.0
  %342 = vmatprep.subr.mxu0 0.0
  %343 = vmatpush1.msra.mxu0 0.0
  %344 = vmatprep.subr.mxu0 0.0
  %345 = vmatpush1.msra.mxu0 0.0
  %346 = vmatprep.subr.mxu0 0.0
  %347 = vmatpush1.msra.mxu0 0.0
  %348 = vmatprep.subr.mxu0 0.0
  %349 = vmatpush1.msra.mxu0 0.0
  %350 = vmatprep.subr.mxu0 0.0
  %351 = vmatpush1.msra.mxu0 0.0
  %352 = vmatprep.subr.mxu0 0.0
  %353 = vmatpush1.msra.mxu0 0.0
  %354 = vmatprep.subr.mxu0 0.0
  %355 = vmatpush1.msra.mxu0 0.0
  %356 = vmatprep.subr.mxu0 0.0
  %357 = vmatpush1.msra.mxu0 0.0
  %358 = vmatprep.subr.mxu0 0.0
  %359 = vmatpush1.msra.mxu0 0.0
  %360 = vmatprep.subr.mxu0 0.0
  %361 = vmatpush1.msra.mxu0 0.0
  %362 = vmatprep.subr.mxu0 0.0
  %363 = vmatpush1.msra.mxu0 0.0
  %364 = vmatprep.subr.mxu0 0.0
  %365 = vmatpush1.msra.mxu0 0.0
  %366 = vmatprep.subr.mxu0 0.0
  %367 = vmatpush1.msra.mxu0 0.0
  %368 = vmatprep.subr.mxu0 0.0
  %369 = vmatpush1.msra.mxu0 0.0
  %370 = vmatprep.mubr.f32.mxu0 0.0
  %371 = vmatmul.mubr.f32.gmra.mrb[0].mxu0 %v298
  %v372 = vpop.f32.mrb[0].mxu0
  %v373 = vadd.f32 %v287, %v372
  %v374 = vpop.f32.mrb[0].mxu0
  %375 = vmatprep.mubr.f32.mxu0 0.0
  %376 = vmatmul.mubr.f32.gmra.mrb[0].mxu0 %v300
  %v377 = vpop.f32.mrb[0].mxu0
  %v378 = vadd.f32 %v291, %v377
  %v379 = vpop.f32.mrb[0].mxu0
  %380 = vdwg.mxu0
  %v381 = vxor.u32 %v373, 2147483648
  %v382 = vxor.u32 %v378, 2147483648
  %v383 = vmul.f32 %v381, 1.442695
  %v384 = vpow.pop %v383
  %v385 = vmul.f32 %v382, 1.442695
  %v386 = vpow.pop %v385
  %v387 = vadd.f32 %v384, 1.0
  %v388 = vadd.f32 %v386, 1.0
  %v389 = vrcp.pop %v387
  %v390 = vmul.f32 1.0, %v389
  %v391 = vrcp.pop %v388
  %v392 = vmul.f32 1.0, %v391
  %v393 = vadd.f32 %v390, 1.0
  %v394 = vadd.f32 %v392, 1.0
  %v395 = vmul.f32 %v202, %v393
  %v396 = vmul.f32 %v203, %v394
  %v397 = vunpack.c.l.bf16 %v17
  %v398 = vunpack.c.l.bf16 %v18
  %400 = vset.pattern.permute.xlu0 0
  %401 = vperm.xlu0 %400, %v395
  %v402 = vpop.permute.xlu0 %401
  %405 = vset.pattern.permute.xlu0 0
  %406 = vperm.xlu0 %405, %v396
  %v407 = vpop.permute.xlu0 %406
  %v409 = vmul.f32 %v402, %v397
  %v410 = vmul.f32 %v407, %v398
  %v411 = vadd.f32 %v409, %v410
  %v412 = vrot.slane %v411, 4
  %v413 = vadd.f32 %v411, %v412
  %v414 = vrot.slane %v413, 2
  %v415 = vadd.f32 %v413, %v414
  %v416 = vrot.slane %v415, 1
  %v417 = vadd.f32 %v415, %v416
  %418 = vset.pattern.permute.xlu0 1
  %419 = vperm.xlu0 %418, %v395
  %v420 = vpop.permute.xlu0 %419
  %422 = vset.pattern.permute.xlu0 1
  %423 = vperm.xlu0 %422, %v396
  %v424 = vpop.permute.xlu0 %423
  %v426 = vmul.f32 %v420, %v397
  %v427 = vmul.f32 %v424, %v398
  %v428 = vadd.f32 %v426, %v427
  %v429 = vrot.slane %v428, 4
  %v430 = vadd.f32 %v428, %v429
  %v431 = vrot.slane %v430, 2
  %v432 = vadd.f32 %v430, %v431
  %v433 = vrot.slane %v432, 1
  %v434 = vadd.f32 %v432, %v433
  %vm435 = vcmask 1040384
  %v436 = vsel %vm435, %v417, %v434
  %v437 = vlaneseq
  %v438 = vshrl.u32 %v437, 7
  %v439 = vsub.s32 0, %v438
  %v440 = vrot.slane %v22, %v439
  %v441 = vadd.f32 %v436, %v440
  %vm442 = vcmask 1041408
  %v443 = vsel %vm442, %v441, 0.0
  %444 = vst [vmem:[%s3] sm:$0xff] %v443
  // Predicated region
  $region14: #{seresnet_forward.1} parent=0 // pred_check
    _
  $region15: #{seresnet_forward.1} parent=0 // pred_check_branch
    %446 = sbr.rel (0) target = $region17
  $region16: #{seresnet_forward.1} parent=0 // pred_region
    _
  $region17: #{seresnet_forward.1} parent=0 // pred_fallthru
    _
  // Predicated region
  $region18: #{seresnet_forward.1} parent=0 // pred_check
    _
  $region19: #{seresnet_forward.1} parent=0 // pred_check_branch
    %448 = sbr.rel (0) target = $region21
  $region20: #{seresnet_forward.1} parent=0 // pred_region
    _
  $region21: #{seresnet_forward.1} parent=0 // pred_fallthru
    _

</llo_original>
